<compile_context>
chip_gen: v6e
topology: v6e:2x2x1
jax: 0.10.0
libtpu: 0.0.40
codegen_flags: <defaults>
</compile_context>

<pallas_src>
import functools

import jax
import jax.numpy as jnp
from jax import lax
from jax.experimental import pallas as pl
from jax.experimental.pallas import tpu as pltpu

_NEG = -1e30                       # padded-lane bias: exp() underflows to 0.
_HP = jax.lax.Precision.HIGHEST    # true-f32 matmuls outside the kernel.


def rnn_seq_kernel(hid0_ref, pre_ref, wh_ref, out_ref, hid_out_ref,
                   *, o_pad, tt, t_total, t_pad):
    """One grid step = TT timesteps of the recurrence.

    pre_ref holds the precomputed time-parallel part of the affine layers
    (race / input / bias contributions with i2o->o2o and h@A already folded),
    so the only serial work per timestep is one (B,H)x(H, o_pad+H) matmul
    plus the log-softmax.
    """
    c = pl.program_id(0)

    # Initialize the recurrent carry from hidden0 on the first chunk; the
    # hidden output block has a constant index_map so it stays resident in
    # VMEM across all grid steps and serves as the carry.
    @pl.when(c == 0)
    def _():
        hid_out_ref[...] = hid0_ref[...]

    wh = wh_ref[...]                 # (H, o_pad + H) resident fused weight.

    def step(i, hid):
        # big = [logits | new_hidden]; only new_hidden is on the serial
        # critical path, so with unroll=True the scheduler can overlap this
        # step's softmax (EUP/XLU) with the next step's matmul (MXU).
        big = pre_ref[i] + jnp.dot(hid, wh, preferred_element_type=jnp.float32)
        new_hid = big[:, o_pad:]                     # (B_pad, H)
        logits = big[:, :o_pad]                      # (B_pad, o_pad)

        # Dropout(p=0.4): identity in eval/inference mode.
        # TODO(synk): training-mode dropout (scaled Bernoulli via pltpu.prng_*).

        # LogSoftmax(dim=1); padded lanes sit at ~-1e30 so exp() -> 0 and they
        # do not perturb the real lanes.  f32 elementwise math throughout.
        m = jnp.max(logits, axis=1, keepdims=True)
        z = logits - m
        lse = jnp.log(jnp.sum(jnp.exp(z), axis=1, keepdims=True))
        out_ref[i] = z - lse                         # lane-dense (B_pad, 128)

        if t_pad > t_total:
            # Only advance the carry on real (non-padded) timesteps; this
            # branch is resolved at trace time when T divides evenly.
            return jnp.where(c * tt + i < t_total, new_hid, hid)
        return new_hid

    hid_out_ref[...] = lax.fori_loop(0, tt, step, hid_out_ref[...],
                                     unroll=True)


def prepare_params(params, n_races, input_size):
    """One-time fold / fuse / pad of the torch-layout weights.

    Folds BOTH the i2o->o2o path and the o2o hidden path (h@A) into a single
    (C, O) weight (exact up to summation order), then fuses it with i2h along
    the output (lane) axis and pads the output lanes to a multiple of 128."""
    H = params["w_i2h"].shape[0]
    O = params["w_i2o"].shape[0]
    o_pad = ((O + 127) // 128) * 128

    w_i2h_t = params["w_i2h"].T                    # (C, H)
    w_i2o_t = params["w_i2o"].T                    # (C, O)
    a_mat = params["w_o2o"][:, :H].T               # (H, O)  o2o hidden part
    bo_mat = params["w_o2o"][:, H:].T              # (O, O)  o2o output part

    #   o = xc @ (Wi2h^T@A + Wi2o^T@Bo) + (b_i2h@A + b_i2o@Bo + b_o2o)
    w_fold = (jnp.dot(w_i2h_t, a_mat, precision=_HP)
              + jnp.dot(w_i2o_t, bo_mat, precision=_HP))            # (C, O)
    b_fold = (jnp.dot(params["b_i2h"], a_mat, precision=_HP)
              + jnp.dot(params["b_i2o"], bo_mat, precision=_HP)
              + params["b_o2o"])                                    # (O,)

    C = w_fold.shape[0]
    w_fold_p = jnp.zeros((C, o_pad), jnp.float32).at[:, :O].set(w_fold)
    b_fold_p = jnp.full((o_pad,), _NEG, jnp.float32).at[:O].set(b_fold)

    # Fuse the (padded) folded output path with i2h along the output axis.
    w_big = jnp.concatenate([w_fold_p, w_i2h_t], axis=1)        # (C, o_pad+H)
    b_big = jnp.concatenate([b_fold_p, params["b_i2h"]]).reshape(1, o_pad + H)

    return {
        "w_big_r": w_big[:n_races],                             # race chunk
        "w_big_i": w_big[n_races:n_races + input_size],         # input chunk
        "w_big_h": w_big[n_races + input_size:],                # hidden chunk
        "b_big": b_big,
    }


def rnn_forward_seq(race, inputs, hidden0, prepped, *, out_size, tt=16):
    """Run the RNN cell over a whole sequence in a single pallas_call.

    race:    (B, n_races)        fixed per sequence
    inputs:  (T, B, input_size)  per-step (one-hot char) inputs
    hidden0: (B, H)              initial hidden state
    Returns (log_probs (T, B, out_size), final_hidden (B, H)).
    """
    T, B, _ = inputs.shape
    H = prepped["w_big_h"].shape[0]
    wide = prepped["b_big"].shape[1]
    o_pad = wide - H

    # Pad batch to 8 sublanes (unmasked stores).
    b_pad = ((B + 7) // 8) * 8
    pb = b_pad - B
    race_p = jnp.pad(race, ((0, pb), (0, 0)))
    inputs_p = jnp.pad(inputs, ((0, 0), (0, pb), (0, 0)))
    hid_p = jnp.pad(hidden0, ((0, pb), (0, 0)))

    # Hoist everything that is not truly sequential out of the recurrence:
    # race term (constant over t) + per-step input term + bias, as one big
    # batched matmul over all T steps (much better MXU utilization).
    base = jnp.dot(race_p, prepped["w_big_r"], precision=_HP) + prepped["b_big"]
    pre = jnp.einsum("tbi,iw->tbw", inputs_p, prepped["w_big_i"],
                     precision=_HP) + base                      # (T, b_pad, wide)

    # Chunk the time axis: TT steps per grid iteration.
    tt = min(tt, T)
    n_chunks = pl.cdiv(T, tt)
    t_pad = n_chunks * tt
    if t_pad > T:
        pre = jnp.pad(pre, ((0, t_pad - T), (0, 0), (0, 0)))

    kernel = functools.partial(rnn_seq_kernel, o_pad=o_pad, tt=tt,
                               t_total=T, t_pad=t_pad)
    const2 = lambda c: (0, 0)

    out_p, hid_out_p = pl.pallas_call(
        kernel,
        grid=(n_chunks,),
        in_specs=[
            pl.BlockSpec((b_pad, H), const2),                       # hidden0 (resident)
            pl.BlockSpec((tt, b_pad, wide), lambda c: (c, 0, 0)),   # pre[t] chunk
            pl.BlockSpec((H, wide), const2),                        # fused Wh (resident)
        ],
        out_specs=(
            pl.BlockSpec((tt, b_pad, o_pad), lambda c: (c, 0, 0)),  # log-prob slab
            pl.BlockSpec((b_pad, H), const2),                       # final hidden (carry)
        ),
        out_shape=(
            jax.ShapeDtypeStruct((t_pad, b_pad, o_pad), jnp.float32),
            jax.ShapeDtypeStruct((b_pad, H), jnp.float32),
        ),
        compiler_params=pltpu.CompilerParams(
            # Time-chunk axis is a true recurrence -> "arbitrary".
            dimension_semantics=("arbitrary",)),
    )(hid_p, pre, prepped["w_big_h"])

    return out_p[:T, :B, :out_size], hid_out_p[:B]


def init_params(key, n_races, input_size, hidden_size, output_size):
    """Deterministic PyTorch-Linear-style init: U(-1/sqrt(fan_in), 1/sqrt(fan_in))."""
    combined = n_races + input_size + hidden_size
    ho = hidden_size + output_size
    ks = jax.random.split(key, 6)

    def lin(kw, kb, out_f, in_f):
        bound = 1.0 / jnp.sqrt(jnp.float32(in_f))
        w = jax.random.uniform(kw, (out_f, in_f), jnp.float32, -bound, bound)
        b = jax.random.uniform(kb, (out_f,), jnp.float32, -bound, bound)
        return w, b

    w_i2h, b_i2h = lin(ks[0], ks[1], hidden_size, combined)
    w_i2o, b_i2o = lin(ks[2], ks[3], output_size, combined)
    w_o2o, b_o2o = lin(ks[4], ks[5], output_size, ho)
    return {"w_i2h": w_i2h, "b_i2h": b_i2h,
            "w_i2o": w_i2o, "b_i2o": b_i2o,
            "w_o2o": w_o2o, "b_o2o": b_o2o}


def rnn_step_ref(race, inp, hid, params):
    """Pure-JAX reference of the original per-step module (eval-mode dropout),
    computed in true f32 to match the module's f32 semantics."""
    xc = jnp.concatenate([race, inp, hid], axis=1)
    h = jnp.dot(xc, params["w_i2h"].T, precision=_HP) + params["b_i2h"]
    o = jnp.dot(xc, params["w_i2o"].T, precision=_HP) + params["b_i2o"]
    oc = jnp.concatenate([h, o], axis=1)
    o = jnp.dot(oc, params["w_o2o"].T, precision=_HP) + params["b_o2o"]
    return jax.nn.log_softmax(o, axis=1), h


if __name__ == "__main__":
    B = 2
    T = 8
    n_races = 8
    input_size = 32
    hidden_size = 32
    output_size = 32

    key = jax.random.PRNGKey(0)
    k_par, k_race, k_inp = jax.random.split(key, 3)

    params = init_params(k_par, n_races, input_size, hidden_size, output_size)
    prepped = prepare_params(params, n_races, input_size)   # one-time prep

    # race: one-hot category (fixed per sequence); inputs: one-hot char per step.
    race = jax.nn.one_hot(jax.random.randint(k_race, (B,), 0, n_races),
                          n_races, dtype=jnp.float32)
    inputs = jax.nn.one_hot(jax.random.randint(k_inp, (T, B), 0, input_size),
                            input_size, dtype=jnp.float32)
    hidden0 = jnp.zeros((B, hidden_size), jnp.float32)       # initHidden(), batched

    forward = jax.jit(rnn_forward_seq, static_argnames=("out_size", "tt"))
    out, final_hidden = forward(race, inputs, hidden0, prepped,
                                out_size=output_size)
    jax.block_until_ready((out, final_hidden))

    # Pure-JAX reference: the original per-step forward, looped over T.
    outs = []
    hid = hidden0
    for t in range(T):
        o_t, hid = rnn_step_ref(race, inputs[t], hid, params)
        outs.append(o_t)
    out_ref = jnp.stack(outs, axis=0)

    assert out.shape == (T, B, output_size)
    assert final_hidden.shape == (B, hidden_size)
    assert jnp.allclose(out, out_ref, atol=1e-4, rtol=1e-4), \
        "log-prob mismatch vs reference"
    assert jnp.allclose(final_hidden, hid, atol=1e-4, rtol=1e-4), \
        "hidden mismatch vs reference"

    print("KERNEL_OK")
</pallas_src>

<mosaic_0001>
module attributes {stable_mosaic.version = 11 : i64} {
  func.func @rnn_seq_kernel(%arg0: i32, %arg1: memref<8x32xf32, #tpu.memory_space<vmem>>, %arg2: memref<8x8x160xf32, #tpu.memory_space<vmem>>, %arg3: memref<32x160xf32, #tpu.memory_space<vmem>>, %arg4: memref<8x8x128xf32, #tpu.memory_space<vmem>>, %arg5: memref<8x32xf32, #tpu.memory_space<vmem>>) attributes {dimension_semantics = [#tpu.dimension_semantics<arbitrary>], iteration_bounds = array<i64: 1>, scalar_prefetch = 0 : i64, scratch_operands = 0 : i64, tpu.core_type = #tpu.core_type<tc>, window_params = [{pipeline_mode = #tpu.pipeline_mode<synchronous>, transform_indices = @transform_0, window_bounds = array<i64: 8, 32>}, {transform_indices = @transform_1, window_bounds = array<i64: 8, 8, 160>}, {pipeline_mode = #tpu.pipeline_mode<synchronous>, transform_indices = @transform_2, window_bounds = array<i64: 32, 160>}, {transform_indices = @transform_3, window_bounds = array<i64: 8, 8, 128>}, {pipeline_mode = #tpu.pipeline_mode<synchronous>, transform_indices = @transform_4, window_bounds = array<i64: 8, 32>}]} {
    %c0_i32 = arith.constant 0 : i32
    %0 = arith.cmpi eq, %arg0, %c0_i32 : i32
    %1 = arith.extui %0 : i1 to i32
    %c0_i32_0 = arith.constant 0 : i32
    %2 = arith.cmpi ne, %1, %c0_i32_0 : i32
    scf.if %2 {
      %c0_62 = arith.constant 0 : index
      %c0_63 = arith.constant 0 : index
      %174 = vector.load %arg1[%c0_62, %c0_63] : memref<8x32xf32, #tpu.memory_space<vmem>>, vector<8x32xf32>
      %c0_64 = arith.constant 0 : index
      %c0_65 = arith.constant 0 : index
      %175 = vector.load %arg5[%c0_64, %c0_65] : memref<8x32xf32, #tpu.memory_space<vmem>>, vector<8x32xf32>
      tpu.vector_store %arg5[%c0_64, %c0_65], %174 {strides = array<i32>} : memref<8x32xf32, #tpu.memory_space<vmem>>, vector<8x32xf32>,
    } else {
    }
    %c0 = arith.constant 0 : index
    %c0_1 = arith.constant 0 : index
    %3 = vector.load %arg3[%c0, %c0_1] : memref<32x160xf32, #tpu.memory_space<vmem>>, vector<32x160xf32>
    %c0_2 = arith.constant 0 : index
    %c0_3 = arith.constant 0 : index
    %4 = vector.load %arg5[%c0_2, %c0_3] : memref<8x32xf32, #tpu.memory_space<vmem>>, vector<8x32xf32>
    %c0_i32_4 = arith.constant 0 : i32
    %5 = arith.index_cast %c0_i32_4 : i32 to index
    %c0_5 = arith.constant 0 : index
    %c0_6 = arith.constant 0 : index
    %6 = vector.load %arg2[%5, %c0_5, %c0_6] : memref<8x8x160xf32, #tpu.memory_space<vmem>>, vector<1x8x160xf32>
    %7 = vector.shape_cast %6 : vector<1x8x160xf32> to vector<8x160xf32>
    %cst = arith.constant dense<0.000000e+00> : vector<8x160xf32>
    %8 = tpu.matmul %4, %3, %cst {dimension_numbers = #tpu.dot_dimension_numbers<[1], [0], [0], [1], [0, 0, 1, 1], [], []>} : vector<8x32xf32>, vector<32x160xf32>, vector<8x160xf32> -> vector<8x160xf32>
    %9 = arith.addf %7, %8 : vector<8x160xf32>
    %10 = vector.extract_strided_slice %9 {offsets = [0, 128], sizes = [8, 32], strides = [1, 1]} : vector<8x160xf32> to vector<8x32xf32>
    %11 = vector.extract_strided_slice %9 {offsets = [0, 0], sizes = [8, 128], strides = [1, 1]} : vector<8x160xf32> to vector<8x128xf32>
    %cst_7 = arith.constant dense<0xFF800000> : vector<8xf32>
    %12 = vector.multi_reduction <maximumf>, %11, %cst_7 [1] : vector<8x128xf32> to vector<8xf32>
    %13 = vector.shape_cast %12 : vector<8xf32> to vector<8x1xf32>
    %14 = vector.broadcast %13 : vector<8x1xf32> to vector<8x128xf32>
    %15 = arith.subf %11, %14 : vector<8x128xf32>
    %16 = math.exp %15 : vector<8x128xf32>
    %cst_8 = arith.constant dense<0.000000e+00> : vector<8xf32>
    %17 = vector.multi_reduction <add>, %16, %cst_8 [1] : vector<8x128xf32> to vector<8xf32>
    %18 = vector.shape_cast %17 : vector<8xf32> to vector<8x1xf32>
    %19 = math.log %18 : vector<8x1xf32>
    %20 = vector.broadcast %19 : vector<8x1xf32> to vector<8x128xf32>
    %21 = arith.subf %15, %20 : vector<8x128xf32>
    %22 = arith.index_cast %c0_i32_4 : i32 to index
    %c0_9 = arith.constant 0 : index
    %c0_10 = arith.constant 0 : index
    %23 = vector.load %arg4[%22, %c0_9, %c0_10] : memref<8x8x128xf32, #tpu.memory_space<vmem>>, vector<1x8x128xf32>
    %24 = vector.shape_cast %23 : vector<1x8x128xf32> to vector<8x128xf32>
    %25 = vector.shape_cast %21 : vector<8x128xf32> to vector<1x8x128xf32>
    tpu.vector_store %arg4[%22, %c0_9, %c0_10], %25 {strides = array<i32>} : memref<8x8x128xf32, #tpu.memory_space<vmem>>, vector<1x8x128xf32>,
    %c1_i32 = arith.constant 1 : i32
    %26 = arith.index_cast %c1_i32 : i32 to index
    %c0_11 = arith.constant 0 : index
    %c0_12 = arith.constant 0 : index
    %27 = vector.load %arg2[%26, %c0_11, %c0_12] : memref<8x8x160xf32, #tpu.memory_space<vmem>>, vector<1x8x160xf32>
    %28 = vector.shape_cast %27 : vector<1x8x160xf32> to vector<8x160xf32>
    %cst_13 = arith.constant dense<0.000000e+00> : vector<8x160xf32>
    %29 = tpu.matmul %10, %3, %cst_13 {dimension_numbers = #tpu.dot_dimension_numbers<[1], [0], [0], [1], [0, 0, 1, 1], [], []>} : vector<8x32xf32>, vector<32x160xf32>, vector<8x160xf32> -> vector<8x160xf32>
    %30 = arith.addf %28, %29 : vector<8x160xf32>
    %31 = vector.extract_strided_slice %30 {offsets = [0, 128], sizes = [8, 32], strides = [1, 1]} : vector<8x160xf32> to vector<8x32xf32>
    %32 = vector.extract_strided_slice %30 {offsets = [0, 0], sizes = [8, 128], strides = [1, 1]} : vector<8x160xf32> to vector<8x128xf32>
    %cst_14 = arith.constant dense<0xFF800000> : vector<8xf32>
    %33 = vector.multi_reduction <maximumf>, %32, %cst_14 [1] : vector<8x128xf32> to vector<8xf32>
    %34 = vector.shape_cast %33 : vector<8xf32> to vector<8x1xf32>
    %35 = vector.broadcast %34 : vector<8x1xf32> to vector<8x128xf32>
    %36 = arith.subf %32, %35 : vector<8x128xf32>
    %37 = math.exp %36 : vector<8x128xf32>
    %cst_15 = arith.constant dense<0.000000e+00> : vector<8xf32>
    %38 = vector.multi_reduction <add>, %37, %cst_15 [1] : vector<8x128xf32> to vector<8xf32>
    %39 = vector.shape_cast %38 : vector<8xf32> to vector<8x1xf32>
    %40 = math.log %39 : vector<8x1xf32>
    %41 = vector.broadcast %40 : vector<8x1xf32> to vector<8x128xf32>
    %42 = arith.subf %36, %41 : vector<8x128xf32>
    %43 = arith.index_cast %c1_i32 : i32 to index
    %c0_16 = arith.constant 0 : index
    %c0_17 = arith.constant 0 : index
    %44 = vector.load %arg4[%43, %c0_16, %c0_17] : memref<8x8x128xf32, #tpu.memory_space<vmem>>, vector<1x8x128xf32>
    %45 = vector.shape_cast %44 : vector<1x8x128xf32> to vector<8x128xf32>
    %46 = vector.shape_cast %42 : vector<8x128xf32> to vector<1x8x128xf32>
    tpu.vector_store %arg4[%43, %c0_16, %c0_17], %46 {strides = array<i32>} : memref<8x8x128xf32, #tpu.memory_space<vmem>>, vector<1x8x128xf32>,
    %c2_i32 = arith.constant 2 : i32
    %47 = arith.index_cast %c2_i32 : i32 to index
    %c0_18 = arith.constant 0 : index
    %c0_19 = arith.constant 0 : index
    %48 = vector.load %arg2[%47, %c0_18, %c0_19] : memref<8x8x160xf32, #tpu.memory_space<vmem>>, vector<1x8x160xf32>
    %49 = vector.shape_cast %48 : vector<1x8x160xf32> to vector<8x160xf32>
    %cst_20 = arith.constant dense<0.000000e+00> : vector<8x160xf32>
    %50 = tpu.matmul %31, %3, %cst_20 {dimension_numbers = #tpu.dot_dimension_numbers<[1], [0], [0], [1], [0, 0, 1, 1], [], []>} : vector<8x32xf32>, vector<32x160xf32>, vector<8x160xf32> -> vector<8x160xf32>
    %51 = arith.addf %49, %50 : vector<8x160xf32>
    %52 = vector.extract_strided_slice %51 {offsets = [0, 128], sizes = [8, 32], strides = [1, 1]} : vector<8x160xf32> to vector<8x32xf32>
    %53 = vector.extract_strided_slice %51 {offsets = [0, 0], sizes = [8, 128], strides = [1, 1]} : vector<8x160xf32> to vector<8x128xf32>
    %cst_21 = arith.constant dense<0xFF800000> : vector<8xf32>
    %54 = vector.multi_reduction <maximumf>, %53, %cst_21 [1] : vector<8x128xf32> to vector<8xf32>
    %55 = vector.shape_cast %54 : vector<8xf32> to vector<8x1xf32>
    %56 = vector.broadcast %55 : vector<8x1xf32> to vector<8x128xf32>
    %57 = arith.subf %53, %56 : vector<8x128xf32>
    %58 = math.exp %57 : vector<8x128xf32>
    %cst_22 = arith.constant dense<0.000000e+00> : vector<8xf32>
    %59 = vector.multi_reduction <add>, %58, %cst_22 [1] : vector<8x128xf32> to vector<8xf32>
    %60 = vector.shape_cast %59 : vector<8xf32> to vector<8x1xf32>
    %61 = math.log %60 : vector<8x1xf32>
    %62 = vector.broadcast %61 : vector<8x1xf32> to vector<8x128xf32>
    %63 = arith.subf %57, %62 : vector<8x128xf32>
    %64 = arith.index_cast %c2_i32 : i32 to index
    %c0_23 = arith.constant 0 : index
    %c0_24 = arith.constant 0 : index
    %65 = vector.load %arg4[%64, %c0_23, %c0_24] : memref<8x8x128xf32, #tpu.memory_space<vmem>>, vector<1x8x128xf32>
    %66 = vector.shape_cast %65 : vector<1x8x128xf32> to vector<8x128xf32>
    %67 = vector.shape_cast %63 : vector<8x128xf32> to vector<1x8x128xf32>
    tpu.vector_store %arg4[%64, %c0_23, %c0_24], %67 {strides = array<i32>} : memref<8x8x128xf32, #tpu.memory_space<vmem>>, vector<1x8x128xf32>,
    %c3_i32 = arith.constant 3 : i32
    %68 = arith.index_cast %c3_i32 : i32 to index
    %c0_25 = arith.constant 0 : index
    %c0_26 = arith.constant 0 : index
    %69 = vector.load %arg2[%68, %c0_25, %c0_26] : memref<8x8x160xf32, #tpu.memory_space<vmem>>, vector<1x8x160xf32>
    %70 = vector.shape_cast %69 : vector<1x8x160xf32> to vector<8x160xf32>
    %cst_27 = arith.constant dense<0.000000e+00> : vector<8x160xf32>
    %71 = tpu.matmul %52, %3, %cst_27 {dimension_numbers = #tpu.dot_dimension_numbers<[1], [0], [0], [1], [0, 0, 1, 1], [], []>} : vector<8x32xf32>, vector<32x160xf32>, vector<8x160xf32> -> vector<8x160xf32>
    %72 = arith.addf %70, %71 : vector<8x160xf32>
    %73 = vector.extract_strided_slice %72 {offsets = [0, 128], sizes = [8, 32], strides = [1, 1]} : vector<8x160xf32> to vector<8x32xf32>
    %74 = vector.extract_strided_slice %72 {offsets = [0, 0], sizes = [8, 128], strides = [1, 1]} : vector<8x160xf32> to vector<8x128xf32>
    %cst_28 = arith.constant dense<0xFF800000> : vector<8xf32>
    %75 = vector.multi_reduction <maximumf>, %74, %cst_28 [1] : vector<8x128xf32> to vector<8xf32>
    %76 = vector.shape_cast %75 : vector<8xf32> to vector<8x1xf32>
    %77 = vector.broadcast %76 : vector<8x1xf32> to vector<8x128xf32>
    %78 = arith.subf %74, %77 : vector<8x128xf32>
    %79 = math.exp %78 : vector<8x128xf32>
    %cst_29 = arith.constant dense<0.000000e+00> : vector<8xf32>
    %80 = vector.multi_reduction <add>, %79, %cst_29 [1] : vector<8x128xf32> to vector<8xf32>
    %81 = vector.shape_cast %80 : vector<8xf32> to vector<8x1xf32>
    %82 = math.log %81 : vector<8x1xf32>
    %83 = vector.broadcast %82 : vector<8x1xf32> to vector<8x128xf32>
    %84 = arith.subf %78, %83 : vector<8x128xf32>
    %85 = arith.index_cast %c3_i32 : i32 to index
    %c0_30 = arith.constant 0 : index
    %c0_31 = arith.constant 0 : index
    %86 = vector.load %arg4[%85, %c0_30, %c0_31] : memref<8x8x128xf32, #tpu.memory_space<vmem>>, vector<1x8x128xf32>
    %87 = vector.shape_cast %86 : vector<1x8x128xf32> to vector<8x128xf32>
    %88 = vector.shape_cast %84 : vector<8x128xf32> to vector<1x8x128xf32>
    tpu.vector_store %arg4[%85, %c0_30, %c0_31], %88 {strides = array<i32>} : memref<8x8x128xf32, #tpu.memory_space<vmem>>, vector<1x8x128xf32>,
    %c4_i32 = arith.constant 4 : i32
    %89 = arith.index_cast %c4_i32 : i32 to index
    %c0_32 = arith.constant 0 : index
    %c0_33 = arith.constant 0 : index
    %90 = vector.load %arg2[%89, %c0_32, %c0_33] : memref<8x8x160xf32, #tpu.memory_space<vmem>>, vector<1x8x160xf32>
    %91 = vector.shape_cast %90 : vector<1x8x160xf32> to vector<8x160xf32>
    %cst_34 = arith.constant dense<0.000000e+00> : vector<8x160xf32>
    %92 = tpu.matmul %73, %3, %cst_34 {dimension_numbers = #tpu.dot_dimension_numbers<[1], [0], [0], [1], [0, 0, 1, 1], [], []>} : vector<8x32xf32>, vector<32x160xf32>, vector<8x160xf32> -> vector<8x160xf32>
    %93 = arith.addf %91, %92 : vector<8x160xf32>
    %94 = vector.extract_strided_slice %93 {offsets = [0, 128], sizes = [8, 32], strides = [1, 1]} : vector<8x160xf32> to vector<8x32xf32>
    %95 = vector.extract_strided_slice %93 {offsets = [0, 0], sizes = [8, 128], strides = [1, 1]} : vector<8x160xf32> to vector<8x128xf32>
    %cst_35 = arith.constant dense<0xFF800000> : vector<8xf32>
    %96 = vector.multi_reduction <maximumf>, %95, %cst_35 [1] : vector<8x128xf32> to vector<8xf32>
    %97 = vector.shape_cast %96 : vector<8xf32> to vector<8x1xf32>
    %98 = vector.broadcast %97 : vector<8x1xf32> to vector<8x128xf32>
    %99 = arith.subf %95, %98 : vector<8x128xf32>
    %100 = math.exp %99 : vector<8x128xf32>
    %cst_36 = arith.constant dense<0.000000e+00> : vector<8xf32>
    %101 = vector.multi_reduction <add>, %100, %cst_36 [1] : vector<8x128xf32> to vector<8xf32>
    %102 = vector.shape_cast %101 : vector<8xf32> to vector<8x1xf32>
    %103 = math.log %102 : vector<8x1xf32>
    %104 = vector.broadcast %103 : vector<8x1xf32> to vector<8x128xf32>
    %105 = arith.subf %99, %104 : vector<8x128xf32>
    %106 = arith.index_cast %c4_i32 : i32 to index
    %c0_37 = arith.constant 0 : index
    %c0_38 = arith.constant 0 : index
    %107 = vector.load %arg4[%106, %c0_37, %c0_38] : memref<8x8x128xf32, #tpu.memory_space<vmem>>, vector<1x8x128xf32>
    %108 = vector.shape_cast %107 : vector<1x8x128xf32> to vector<8x128xf32>
    %109 = vector.shape_cast %105 : vector<8x128xf32> to vector<1x8x128xf32>
    tpu.vector_store %arg4[%106, %c0_37, %c0_38], %109 {strides = array<i32>} : memref<8x8x128xf32, #tpu.memory_space<vmem>>, vector<1x8x128xf32>,
    %c5_i32 = arith.constant 5 : i32
    %110 = arith.index_cast %c5_i32 : i32 to index
    %c0_39 = arith.constant 0 : index
    %c0_40 = arith.constant 0 : index
    %111 = vector.load %arg2[%110, %c0_39, %c0_40] : memref<8x8x160xf32, #tpu.memory_space<vmem>>, vector<1x8x160xf32>
    %112 = vector.shape_cast %111 : vector<1x8x160xf32> to vector<8x160xf32>
    %cst_41 = arith.constant dense<0.000000e+00> : vector<8x160xf32>
    %113 = tpu.matmul %94, %3, %cst_41 {dimension_numbers = #tpu.dot_dimension_numbers<[1], [0], [0], [1], [0, 0, 1, 1], [], []>} : vector<8x32xf32>, vector<32x160xf32>, vector<8x160xf32> -> vector<8x160xf32>
    %114 = arith.addf %112, %113 : vector<8x160xf32>
    %115 = vector.extract_strided_slice %114 {offsets = [0, 128], sizes = [8, 32], strides = [1, 1]} : vector<8x160xf32> to vector<8x32xf32>
    %116 = vector.extract_strided_slice %114 {offsets = [0, 0], sizes = [8, 128], strides = [1, 1]} : vector<8x160xf32> to vector<8x128xf32>
    %cst_42 = arith.constant dense<0xFF800000> : vector<8xf32>
    %117 = vector.multi_reduction <maximumf>, %116, %cst_42 [1] : vector<8x128xf32> to vector<8xf32>
    %118 = vector.shape_cast %117 : vector<8xf32> to vector<8x1xf32>
    %119 = vector.broadcast %118 : vector<8x1xf32> to vector<8x128xf32>
    %120 = arith.subf %116, %119 : vector<8x128xf32>
    %121 = math.exp %120 : vector<8x128xf32>
    %cst_43 = arith.constant dense<0.000000e+00> : vector<8xf32>
    %122 = vector.multi_reduction <add>, %121, %cst_43 [1] : vector<8x128xf32> to vector<8xf32>
    %123 = vector.shape_cast %122 : vector<8xf32> to vector<8x1xf32>
    %124 = math.log %123 : vector<8x1xf32>
    %125 = vector.broadcast %124 : vector<8x1xf32> to vector<8x128xf32>
    %126 = arith.subf %120, %125 : vector<8x128xf32>
    %127 = arith.index_cast %c5_i32 : i32 to index
    %c0_44 = arith.constant 0 : index
    %c0_45 = arith.constant 0 : index
    %128 = vector.load %arg4[%127, %c0_44, %c0_45] : memref<8x8x128xf32, #tpu.memory_space<vmem>>, vector<1x8x128xf32>
    %129 = vector.shape_cast %128 : vector<1x8x128xf32> to vector<8x128xf32>
    %130 = vector.shape_cast %126 : vector<8x128xf32> to vector<1x8x128xf32>
    tpu.vector_store %arg4[%127, %c0_44, %c0_45], %130 {strides = array<i32>} : memref<8x8x128xf32, #tpu.memory_space<vmem>>, vector<1x8x128xf32>,
    %c6_i32 = arith.constant 6 : i32
    %131 = arith.index_cast %c6_i32 : i32 to index
    %c0_46 = arith.constant 0 : index
    %c0_47 = arith.constant 0 : index
    %132 = vector.load %arg2[%131, %c0_46, %c0_47] : memref<8x8x160xf32, #tpu.memory_space<vmem>>, vector<1x8x160xf32>
    %133 = vector.shape_cast %132 : vector<1x8x160xf32> to vector<8x160xf32>
    %cst_48 = arith.constant dense<0.000000e+00> : vector<8x160xf32>
    %134 = tpu.matmul %115, %3, %cst_48 {dimension_numbers = #tpu.dot_dimension_numbers<[1], [0], [0], [1], [0, 0, 1, 1], [], []>} : vector<8x32xf32>, vector<32x160xf32>, vector<8x160xf32> -> vector<8x160xf32>
    %135 = arith.addf %133, %134 : vector<8x160xf32>
    %136 = vector.extract_strided_slice %135 {offsets = [0, 128], sizes = [8, 32], strides = [1, 1]} : vector<8x160xf32> to vector<8x32xf32>
    %137 = vector.extract_strided_slice %135 {offsets = [0, 0], sizes = [8, 128], strides = [1, 1]} : vector<8x160xf32> to vector<8x128xf32>
    %cst_49 = arith.constant dense<0xFF800000> : vector<8xf32>
    %138 = vector.multi_reduction <maximumf>, %137, %cst_49 [1] : vector<8x128xf32> to vector<8xf32>
    %139 = vector.shape_cast %138 : vector<8xf32> to vector<8x1xf32>
    %140 = vector.broadcast %139 : vector<8x1xf32> to vector<8x128xf32>
    %141 = arith.subf %137, %140 : vector<8x128xf32>
    %142 = math.exp %141 : vector<8x128xf32>
    %cst_50 = arith.constant dense<0.000000e+00> : vector<8xf32>
    %143 = vector.multi_reduction <add>, %142, %cst_50 [1] : vector<8x128xf32> to vector<8xf32>
    %144 = vector.shape_cast %143 : vector<8xf32> to vector<8x1xf32>
    %145 = math.log %144 : vector<8x1xf32>
    %146 = vector.broadcast %145 : vector<8x1xf32> to vector<8x128xf32>
    %147 = arith.subf %141, %146 : vector<8x128xf32>
    %148 = arith.index_cast %c6_i32 : i32 to index
    %c0_51 = arith.constant 0 : index
    %c0_52 = arith.constant 0 : index
    %149 = vector.load %arg4[%148, %c0_51, %c0_52] : memref<8x8x128xf32, #tpu.memory_space<vmem>>, vector<1x8x128xf32>
    %150 = vector.shape_cast %149 : vector<1x8x128xf32> to vector<8x128xf32>
    %151 = vector.shape_cast %147 : vector<8x128xf32> to vector<1x8x128xf32>
    tpu.vector_store %arg4[%148, %c0_51, %c0_52], %151 {strides = array<i32>} : memref<8x8x128xf32, #tpu.memory_space<vmem>>, vector<1x8x128xf32>,
    %c7_i32 = arith.constant 7 : i32
    %152 = arith.index_cast %c7_i32 : i32 to index
    %c0_53 = arith.constant 0 : index
    %c0_54 = arith.constant 0 : index
    %153 = vector.load %arg2[%152, %c0_53, %c0_54] : memref<8x8x160xf32, #tpu.memory_space<vmem>>, vector<1x8x160xf32>
    %154 = vector.shape_cast %153 : vector<1x8x160xf32> to vector<8x160xf32>
    %cst_55 = arith.constant dense<0.000000e+00> : vector<8x160xf32>
    %155 = tpu.matmul %136, %3, %cst_55 {dimension_numbers = #tpu.dot_dimension_numbers<[1], [0], [0], [1], [0, 0, 1, 1], [], []>} : vector<8x32xf32>, vector<32x160xf32>, vector<8x160xf32> -> vector<8x160xf32>
    %156 = arith.addf %154, %155 : vector<8x160xf32>
    %157 = vector.extract_strided_slice %156 {offsets = [0, 128], sizes = [8, 32], strides = [1, 1]} : vector<8x160xf32> to vector<8x32xf32>
    %158 = vector.extract_strided_slice %156 {offsets = [0, 0], sizes = [8, 128], strides = [1, 1]} : vector<8x160xf32> to vector<8x128xf32>
    %cst_56 = arith.constant dense<0xFF800000> : vector<8xf32>
    %159 = vector.multi_reduction <maximumf>, %158, %cst_56 [1] : vector<8x128xf32> to vector<8xf32>
    %160 = vector.shape_cast %159 : vector<8xf32> to vector<8x1xf32>
    %161 = vector.broadcast %160 : vector<8x1xf32> to vector<8x128xf32>
    %162 = arith.subf %158, %161 : vector<8x128xf32>
    %163 = math.exp %162 : vector<8x128xf32>
    %cst_57 = arith.constant dense<0.000000e+00> : vector<8xf32>
    %164 = vector.multi_reduction <add>, %163, %cst_57 [1] : vector<8x128xf32> to vector<8xf32>
    %165 = vector.shape_cast %164 : vector<8xf32> to vector<8x1xf32>
    %166 = math.log %165 : vector<8x1xf32>
    %167 = vector.broadcast %166 : vector<8x1xf32> to vector<8x128xf32>
    %168 = arith.subf %162, %167 : vector<8x128xf32>
    %169 = arith.index_cast %c7_i32 : i32 to index
    %c0_58 = arith.constant 0 : index
    %c0_59 = arith.constant 0 : index
    %170 = vector.load %arg4[%169, %c0_58, %c0_59] : memref<8x8x128xf32, #tpu.memory_space<vmem>>, vector<1x8x128xf32>
    %171 = vector.shape_cast %170 : vector<1x8x128xf32> to vector<8x128xf32>
    %172 = vector.shape_cast %168 : vector<8x128xf32> to vector<1x8x128xf32>
    tpu.vector_store %arg4[%169, %c0_58, %c0_59], %172 {strides = array<i32>} : memref<8x8x128xf32, #tpu.memory_space<vmem>>, vector<1x8x128xf32>,
    %c8_i32 = arith.constant 8 : i32
    %c0_60 = arith.constant 0 : index
    %c0_61 = arith.constant 0 : index
    %173 = vector.load %arg5[%c0_60, %c0_61] : memref<8x32xf32, #tpu.memory_space<vmem>>, vector<8x32xf32>
    tpu.vector_store %arg5[%c0_60, %c0_61], %157 {strides = array<i32>} : memref<8x32xf32, #tpu.memory_space<vmem>>, vector<8x32xf32>,
    return
  }
  func.func @transform_0(%arg0: i32) -> (i32, i32) {
    %c0_i32 = arith.constant 0 : i32
    %c0_i32_0 = arith.constant 0 : i32
    %c0_i32_1 = arith.constant 0 : i32
    return %c0_i32, %c0_i32_0 : i32, i32
  }
  func.func @transform_1(%arg0: i32) -> (i32, i32, i32) {
    %c0_i32 = arith.constant 0 : i32
    %c0_i32_0 = arith.constant 0 : i32
    %c0_i32_1 = arith.constant 0 : i32
    return %arg0, %c0_i32, %c0_i32_0 : i32, i32, i32
  }
  func.func @transform_2(%arg0: i32) -> (i32, i32) {
    %c0_i32 = arith.constant 0 : i32
    %c0_i32_0 = arith.constant 0 : i32
    %c0_i32_1 = arith.constant 0 : i32
    return %c0_i32, %c0_i32_0 : i32, i32
  }
  func.func @transform_3(%arg0: i32) -> (i32, i32, i32) {
    %c0_i32 = arith.constant 0 : i32
    %c0_i32_0 = arith.constant 0 : i32
    %c0_i32_1 = arith.constant 0 : i32
    return %arg0, %c0_i32, %c0_i32_0 : i32, i32, i32
  }
  func.func @transform_4(%arg0: i32) -> (i32, i32) {
    %c0_i32 = arith.constant 0 : i32
    %c0_i32_0 = arith.constant 0 : i32
    %c0_i32_1 = arith.constant 0 : i32
    return %c0_i32, %c0_i32_0 : i32, i32
  }
}

</mosaic_0001>

<llo_original>
// kernel: rnn_forward_seq.1
$region0: #{rnn_forward_seq.1}
  #allocation0 [shape = 'u32[]', space=smem, size = 0x4, offset = 0x4, fixed_abs, tag = 'smem constant byte address 0x4 - core index']
  #allocation1 [shape = 'u32[144,128]{1,0:T(1,128)}', space=vmem, size = 0x12000, scoped, tag = 'internal scratch']
  %s0 = inlined_call_operand.vmem [shape: f32[8,32], index: 0, kind: input, shape index: {}]
  %s1 = inlined_call_operand.vmem [shape: f32[8,8,160], index: 1, kind: input, shape index: {}]
  %s2 = inlined_call_operand.vmem [shape: f32[32,160], index: 2, kind: input, shape index: {}]
  %s3 = inlined_call_operand.vmem [shape: f32[8,8,128], index: 3, kind: output, shape index: {0}]
  %s4 = inlined_call_operand.vmem [shape: f32[8,32], index: 4, kind: output, shape index: {1}]
  %5 = xla_tuple %s3, %s4
  %s6 = sld [smem:[#allocation0]]
  $region34: #{rnn_forward_seq.1} parent=0
    _
  %s8 = ssub.s32 1, %s6
  %s9 = scalar_select 0, %s8, %s6
  // Predicated region
  $region2: #{rnn_forward_seq.1} parent=0 // pred_check
    _
  $region3: #{rnn_forward_seq.1} parent=0 // pred_check_branch
    %11 = sbr.rel (0) target = $region5
  $region4: #{rnn_forward_seq.1} parent=0 // pred_region
    _
  $region5: #{rnn_forward_seq.1} parent=0 // pred_fallthru
    _
  // Predicated region
  $region6: #{rnn_forward_seq.1} parent=0 // pred_check
    _
  $region7: #{rnn_forward_seq.1} parent=0 // pred_check_branch
    %13 = sbr.rel (0) target = $region9
  $region8: #{rnn_forward_seq.1} parent=0 // pred_region
    _
  $region9: #{rnn_forward_seq.1} parent=0 // pred_fallthru
    _
  // Predicated region
  $region10: #{rnn_forward_seq.1} parent=0 // pred_check
    _
  $region11: #{rnn_forward_seq.1} parent=0 // pred_check_branch
    %15 = sbr.rel (0) target = $region13
  $region12: #{rnn_forward_seq.1} parent=0 // pred_region
    _
  $region13: #{rnn_forward_seq.1} parent=0 // pred_fallthru
    _
  %p16 = scmp.eq.s32.totalorder 0, 0
  // Predicated region
  $region14: #{rnn_forward_seq.1} parent=0 // pred_check
    %p17 = pneg %p16
  $region15: #{rnn_forward_seq.1} parent=0 // pred_check_branch
    %19 = sbr.rel (%p17) target = $region17
  $region16: #{rnn_forward_seq.1} parent=0 // pred_region
    %v20 = vld [vmem:[%s0] sm:$0xff]
    %vm21 = vcmask 261120
    %22 = vst.msk [vmem:[%s4] sm:$0xff] %vm21, %v20
  $region17: #{rnn_forward_seq.1} parent=0 // pred_fallthru
    _
  %v23 = vld [vmem:[%s2] sm:$0xff]
  %v24 = vld [vmem:[%s2 + $0x8] sm:$0xff]
  %v25 = vld [vmem:[%s2 + $0x10] sm:$0xff]
  %v26 = vld [vmem:[%s2 + $0x18] sm:$0xff]
  %v27 = vld [vmem:[%s2 + $0x20] sm:$0xff]
  %v28 = vld [vmem:[%s2 + $0x28] sm:$0xff]
  %v29 = vld [vmem:[%s2 + $0x30] sm:$0xff]
  %v30 = vld [vmem:[%s2 + $0x38] sm:$0xff]
  %v31 = vld [vmem:[%s4] sm:$0xff]
  %v32 = vld [vmem:[%s1] sm:$0xff]
  %v33 = vld [vmem:[%s1 + $0x8] sm:$0xff]
  %vm34 = vcmask 261120
  %v36 = vsel %vm34, %v31, 0
  %38 = vmatprep.subr.mxu0 0.0
  %39 = vmatpush1.msra.mxu0 0.0
  %40 = vmatprep.subr.mxu0 0.0
  %41 = vmatpush1.msra.mxu0 0.0
  %42 = vmatprep.subr.mxu0 0.0
  %43 = vmatpush1.msra.mxu0 0.0
  %44 = vmatprep.subr.mxu0 0.0
  %45 = vmatpush1.msra.mxu0 0.0
  %46 = vmatprep.subr.mxu0 0.0
  %47 = vmatpush1.msra.mxu0 0.0
  %48 = vmatprep.subr.mxu0 0.0
  %49 = vmatpush1.msra.mxu0 0.0
  %50 = vmatprep.subr.mxu0 0.0
  %51 = vmatpush1.msra.mxu0 0.0
  %52 = vmatprep.subr.mxu0 0.0
  %53 = vmatpush1.msra.mxu0 0.0
  %54 = vmatprep.subr.mxu0 0.0
  %55 = vmatpush1.msra.mxu0 0.0
  %56 = vmatprep.subr.mxu0 0.0
  %57 = vmatpush1.msra.mxu0 0.0
  %58 = vmatprep.subr.mxu0 0.0
  %59 = vmatpush1.msra.mxu0 0.0
  %60 = vmatprep.subr.mxu0 0.0
  %61 = vmatpush1.msra.mxu0 0.0
  %62 = vmatprep.subr.mxu0 %v30
  %63 = vmatpush1.msra.mxu0 %v29
  %64 = vmatprep.subr.mxu0 %v28
  %65 = vmatpush1.msra.mxu0 %v27
  %66 = vmatprep.subr.mxu0 %v26
  %67 = vmatpush1.msra.mxu0 %v25
  %68 = vmatprep.subr.mxu0 %v24
  %69 = vmatpush1.msra.mxu0 %v23
  %70 = vmatprep.subr.mxu0 0.0
  %71 = vmatpush2.msra.mxu0 0.0
  %72 = vmatprep.subr.mxu0 0.0
  %73 = vmatpush2.msra.mxu0 0.0
  %74 = vmatprep.subr.mxu0 0.0
  %75 = vmatpush2.msra.mxu0 0.0
  %76 = vmatprep.subr.mxu0 0.0
  %77 = vmatpush2.msra.mxu0 0.0
  %78 = vmatprep.subr.mxu0 0.0
  %79 = vmatpush2.msra.mxu0 0.0
  %80 = vmatprep.subr.mxu0 0.0
  %81 = vmatpush2.msra.mxu0 0.0
  %82 = vmatprep.subr.mxu0 0.0
  %83 = vmatpush2.msra.mxu0 0.0
  %84 = vmatprep.subr.mxu0 0.0
  %85 = vmatpush2.msra.mxu0 0.0
  %86 = vmatprep.subr.mxu0 0.0
  %87 = vmatpush2.msra.mxu0 0.0
  %88 = vmatprep.subr.mxu0 0.0
  %89 = vmatpush2.msra.mxu0 0.0
  %90 = vmatprep.subr.mxu0 0.0
  %91 = vmatpush2.msra.mxu0 0.0
  %92 = vmatprep.subr.mxu0 0.0
  %93 = vmatpush2.msra.mxu0 0.0
  %94 = vmatprep.subr.mxu0 0.0
  %95 = vmatpush2.msra.mxu0 0.0
  %96 = vmatprep.subr.mxu0 0.0
  %97 = vmatpush2.msra.mxu0 0.0
  %98 = vmatprep.subr.mxu0 0.0
  %99 = vmatpush2.msra.mxu0 0.0
  %100 = vmatprep.subr.mxu0 0.0
  %101 = vmatpush2.msra.mxu0 0.0
  %102 = vmatprep.mubr.f32.mxu0 0.0
  %103 = vmatmul.mubr.f32.gmra.mxu0 %v36
  %v104 = vpop.f32.mrf.mxu0
  %v105 = vadd.f32 0.0, %v104
  %v106 = vpop.f32.mrf.mxu0
  %v107 = vadd.f32 0.0, %v106
  %108 = vdwg.mxu0
  %v109 = vadd.f32 %v32, %v105
  %v110 = vadd.f32 %v33, %v107
  %111 = vmax.xlane.f32.xlu0 %v109
  %v112 = vpop.xlane.xlu0 %111
  %v113 = vsub.f32 %v109, %v112
  %v114 = vmul.f32 %v113, 1.442695
  %v115 = vpow.pop %v114
  %116 = vadd.xlane.f32.xlu0 %v115
  %v117 = vpop.xlane.xlu0 %116
  %v118 = vlog2.pop %v117
  %v119 = vmul.f32 %v118, 0.6931472
  %v120 = vsub.f32 %v113, %v119
  %121 = vst [vmem:[%s3] sm:$0xff] %v120
  %s122 = scalar_lea.vmem %s1, 16
  %v123 = vld [vmem:[%s122] sm:$0xff]
  %v124 = vld [vmem:[%s122 + $0x8] sm:$0xff]
  %v126 = vsel %vm34, %v110, 0
  %128 = vmatprep.subr.mxu0 0.0
  %129 = vmatpush1.msra.mxu0 0.0
  %130 = vmatprep.subr.mxu0 0.0
  %131 = vmatpush1.msra.mxu0 0.0
  %132 = vmatprep.subr.mxu0 0.0
  %133 = vmatpush1.msra.mxu0 0.0
  %134 = vmatprep.subr.mxu0 0.0
  %135 = vmatpush1.msra.mxu0 0.0
  %136 = vmatprep.subr.mxu0 0.0
  %137 = vmatpush1.msra.mxu0 0.0
  %138 = vmatprep.subr.mxu0 0.0
  %139 = vmatpush1.msra.mxu0 0.0
  %140 = vmatprep.subr.mxu0 0.0
  %141 = vmatpush1.msra.mxu0 0.0
  %142 = vmatprep.subr.mxu0 0.0
  %143 = vmatpush1.msra.mxu0 0.0
  %144 = vmatprep.subr.mxu0 0.0
  %145 = vmatpush1.msra.mxu0 0.0
  %146 = vmatprep.subr.mxu0 0.0
  %147 = vmatpush1.msra.mxu0 0.0
  %148 = vmatprep.subr.mxu0 0.0
  %149 = vmatpush1.msra.mxu0 0.0
  %150 = vmatprep.subr.mxu0 0.0
  %151 = vmatpush1.msra.mxu0 0.0
  %152 = vmatprep.subr.mxu0 %v30
  %153 = vmatpush1.msra.mxu0 %v29
  %154 = vmatprep.subr.mxu0 %v28
  %155 = vmatpush1.msra.mxu0 %v27
  %156 = vmatprep.subr.mxu0 %v26
  %157 = vmatpush1.msra.mxu0 %v25
  %158 = vmatprep.subr.mxu0 %v24
  %159 = vmatpush1.msra.mxu0 %v23
  %160 = vmatprep.subr.mxu0 0.0
  %161 = vmatpush2.msra.mxu0 0.0
  %162 = vmatprep.subr.mxu0 0.0
  %163 = vmatpush2.msra.mxu0 0.0
  %164 = vmatprep.subr.mxu0 0.0
  %165 = vmatpush2.msra.mxu0 0.0
  %166 = vmatprep.subr.mxu0 0.0
  %167 = vmatpush2.msra.mxu0 0.0
  %168 = vmatprep.subr.mxu0 0.0
  %169 = vmatpush2.msra.mxu0 0.0
  %170 = vmatprep.subr.mxu0 0.0
  %171 = vmatpush2.msra.mxu0 0.0
  %172 = vmatprep.subr.mxu0 0.0
  %173 = vmatpush2.msra.mxu0 0.0
  %174 = vmatprep.subr.mxu0 0.0
  %175 = vmatpush2.msra.mxu0 0.0
  %176 = vmatprep.subr.mxu0 0.0
  %177 = vmatpush2.msra.mxu0 0.0
  %178 = vmatprep.subr.mxu0 0.0
  %179 = vmatpush2.msra.mxu0 0.0
  %180 = vmatprep.subr.mxu0 0.0
  %181 = vmatpush2.msra.mxu0 0.0
  %182 = vmatprep.subr.mxu0 0.0
  %183 = vmatpush2.msra.mxu0 0.0
  %184 = vmatprep.subr.mxu0 0.0
  %185 = vmatpush2.msra.mxu0 0.0
  %186 = vmatprep.subr.mxu0 0.0
  %187 = vmatpush2.msra.mxu0 0.0
  %188 = vmatprep.subr.mxu0 0.0
  %189 = vmatpush2.msra.mxu0 0.0
  %190 = vmatprep.subr.mxu0 0.0
  %191 = vmatpush2.msra.mxu0 0.0
  %192 = vmatprep.mubr.f32.mxu0 0.0
  %193 = vmatmul.mubr.f32.gmra.mxu0 %v126
  %v194 = vpop.f32.mrf.mxu0
  %v195 = vadd.f32 0.0, %v194
  %v196 = vpop.f32.mrf.mxu0
  %v197 = vadd.f32 0.0, %v196
  %198 = vdwg.mxu0
  %v199 = vadd.f32 %v123, %v195
  %v200 = vadd.f32 %v124, %v197
  %201 = vmax.xlane.f32.xlu0 %v199
  %v202 = vpop.xlane.xlu0 %201
  %v203 = vsub.f32 %v199, %v202
  %v204 = vmul.f32 %v203, 1.442695
  %v205 = vpow.pop %v204
  %206 = vadd.xlane.f32.xlu0 %v205
  %v207 = vpop.xlane.xlu0 %206
  %v208 = vlog2.pop %v207
  %v209 = vmul.f32 %v208, 0.6931472
  %v210 = vsub.f32 %v203, %v209
  %s211 = scalar_lea.vmem %s3, 8
  %212 = vst [vmem:[%s211] sm:$0xff] %v210
  %s213 = scalar_lea.vmem %s1, 32
  %v214 = vld [vmem:[%s213] sm:$0xff]
  %v215 = vld [vmem:[%s213 + $0x8] sm:$0xff]
  %v217 = vsel %vm34, %v200, 0
  %219 = vmatprep.subr.mxu0 0.0
  %220 = vmatpush1.msra.mxu0 0.0
  %221 = vmatprep.subr.mxu0 0.0
  %222 = vmatpush1.msra.mxu0 0.0
  %223 = vmatprep.subr.mxu0 0.0
  %224 = vmatpush1.msra.mxu0 0.0
  %225 = vmatprep.subr.mxu0 0.0
  %226 = vmatpush1.msra.mxu0 0.0
  %227 = vmatprep.subr.mxu0 0.0
  %228 = vmatpush1.msra.mxu0 0.0
  %229 = vmatprep.subr.mxu0 0.0
  %230 = vmatpush1.msra.mxu0 0.0
  %231 = vmatprep.subr.mxu0 0.0
  %232 = vmatpush1.msra.mxu0 0.0
  %233 = vmatprep.subr.mxu0 0.0
  %234 = vmatpush1.msra.mxu0 0.0
  %235 = vmatprep.subr.mxu0 0.0
  %236 = vmatpush1.msra.mxu0 0.0
  %237 = vmatprep.subr.mxu0 0.0
  %238 = vmatpush1.msra.mxu0 0.0
  %239 = vmatprep.subr.mxu0 0.0
  %240 = vmatpush1.msra.mxu0 0.0
  %241 = vmatprep.subr.mxu0 0.0
  %242 = vmatpush1.msra.mxu0 0.0
  %243 = vmatprep.subr.mxu0 %v30
  %244 = vmatpush1.msra.mxu0 %v29
  %245 = vmatprep.subr.mxu0 %v28
  %246 = vmatpush1.msra.mxu0 %v27
  %247 = vmatprep.subr.mxu0 %v26
  %248 = vmatpush1.msra.mxu0 %v25
  %249 = vmatprep.subr.mxu0 %v24
  %250 = vmatpush1.msra.mxu0 %v23
  %251 = vmatprep.subr.mxu0 0.0
  %252 = vmatpush2.msra.mxu0 0.0
  %253 = vmatprep.subr.mxu0 0.0
  %254 = vmatpush2.msra.mxu0 0.0
  %255 = vmatprep.subr.mxu0 0.0
  %256 = vmatpush2.msra.mxu0 0.0
  %257 = vmatprep.subr.mxu0 0.0
  %258 = vmatpush2.msra.mxu0 0.0
  %259 = vmatprep.subr.mxu0 0.0
  %260 = vmatpush2.msra.mxu0 0.0
  %261 = vmatprep.subr.mxu0 0.0
  %262 = vmatpush2.msra.mxu0 0.0
  %263 = vmatprep.subr.mxu0 0.0
  %264 = vmatpush2.msra.mxu0 0.0
  %265 = vmatprep.subr.mxu0 0.0
  %266 = vmatpush2.msra.mxu0 0.0
  %267 = vmatprep.subr.mxu0 0.0
  %268 = vmatpush2.msra.mxu0 0.0
  %269 = vmatprep.subr.mxu0 0.0
  %270 = vmatpush2.msra.mxu0 0.0
  %271 = vmatprep.subr.mxu0 0.0
  %272 = vmatpush2.msra.mxu0 0.0
  %273 = vmatprep.subr.mxu0 0.0
  %274 = vmatpush2.msra.mxu0 0.0
  %275 = vmatprep.subr.mxu0 0.0
  %276 = vmatpush2.msra.mxu0 0.0
  %277 = vmatprep.subr.mxu0 0.0
  %278 = vmatpush2.msra.mxu0 0.0
  %279 = vmatprep.subr.mxu0 0.0
  %280 = vmatpush2.msra.mxu0 0.0
  %281 = vmatprep.subr.mxu0 0.0
  %282 = vmatpush2.msra.mxu0 0.0
  %283 = vmatprep.mubr.f32.mxu0 0.0
  %284 = vmatmul.mubr.f32.gmra.mxu0 %v217
  %v285 = vpop.f32.mrf.mxu0
  %v286 = vadd.f32 0.0, %v285
  %v287 = vpop.f32.mrf.mxu0
  %v288 = vadd.f32 0.0, %v287
  %289 = vdwg.mxu0
  %v290 = vadd.f32 %v214, %v286
  %v291 = vadd.f32 %v215, %v288
  %292 = vmax.xlane.f32.xlu0 %v290
  %v293 = vpop.xlane.xlu0 %292
  %v294 = vsub.f32 %v290, %v293
  %v295 = vmul.f32 %v294, 1.442695
  %v296 = vpow.pop %v295
  %297 = vadd.xlane.f32.xlu0 %v296
  %v298 = vpop.xlane.xlu0 %297
  %v299 = vlog2.pop %v298
  %v300 = vmul.f32 %v299, 0.6931472
  %v301 = vsub.f32 %v294, %v300
  %s302 = scalar_lea.vmem %s3, 16
  %303 = vst [vmem:[%s302] sm:$0xff] %v301
  %s304 = scalar_lea.vmem %s1, 48
  %v305 = vld [vmem:[%s304] sm:$0xff]
  %v306 = vld [vmem:[%s304 + $0x8] sm:$0xff]
  %v308 = vsel %vm34, %v291, 0
  %310 = vmatprep.subr.mxu0 0.0
  %311 = vmatpush1.msra.mxu0 0.0
  %312 = vmatprep.subr.mxu0 0.0
  %313 = vmatpush1.msra.mxu0 0.0
  %314 = vmatprep.subr.mxu0 0.0
  %315 = vmatpush1.msra.mxu0 0.0
  %316 = vmatprep.subr.mxu0 0.0
  %317 = vmatpush1.msra.mxu0 0.0
  %318 = vmatprep.subr.mxu0 0.0
  %319 = vmatpush1.msra.mxu0 0.0
  %320 = vmatprep.subr.mxu0 0.0
  %321 = vmatpush1.msra.mxu0 0.0
  %322 = vmatprep.subr.mxu0 0.0
  %323 = vmatpush1.msra.mxu0 0.0
  %324 = vmatprep.subr.mxu0 0.0
  %325 = vmatpush1.msra.mxu0 0.0
  %326 = vmatprep.subr.mxu0 0.0
  %327 = vmatpush1.msra.mxu0 0.0
  %328 = vmatprep.subr.mxu0 0.0
  %329 = vmatpush1.msra.mxu0 0.0
  %330 = vmatprep.subr.mxu0 0.0
  %331 = vmatpush1.msra.mxu0 0.0
  %332 = vmatprep.subr.mxu0 0.0
  %333 = vmatpush1.msra.mxu0 0.0
  %334 = vmatprep.subr.mxu0 %v30
  %335 = vmatpush1.msra.mxu0 %v29
  %336 = vmatprep.subr.mxu0 %v28
  %337 = vmatpush1.msra.mxu0 %v27
  %338 = vmatprep.subr.mxu0 %v26
  %339 = vmatpush1.msra.mxu0 %v25
  %340 = vmatprep.subr.mxu0 %v24
  %341 = vmatpush1.msra.mxu0 %v23
  %342 = vmatprep.subr.mxu0 0.0
  %343 = vmatpush2.msra.mxu0 0.0
  %344 = vmatprep.subr.mxu0 0.0
  %345 = vmatpush2.msra.mxu0 0.0
  %346 = vmatprep.subr.mxu0 0.0
  %347 = vmatpush2.msra.mxu0 0.0
  %348 = vmatprep.subr.mxu0 0.0
  %349 = vmatpush2.msra.mxu0 0.0
  %350 = vmatprep.subr.mxu0 0.0
  %351 = vmatpush2.msra.mxu0 0.0
  %352 = vmatprep.subr.mxu0 0.0
  %353 = vmatpush2.msra.mxu0 0.0
  %354 = vmatprep.subr.mxu0 0.0
  %355 = vmatpush2.msra.mxu0 0.0
  %356 = vmatprep.subr.mxu0 0.0
  %357 = vmatpush2.msra.mxu0 0.0
  %358 = vmatprep.subr.mxu0 0.0
  %359 = vmatpush2.msra.mxu0 0.0
  %360 = vmatprep.subr.mxu0 0.0
  %361 = vmatpush2.msra.mxu0 0.0
  %362 = vmatprep.subr.mxu0 0.0
  %363 = vmatpush2.msra.mxu0 0.0
  %364 = vmatprep.subr.mxu0 0.0
  %365 = vmatpush2.msra.mxu0 0.0
  %366 = vmatprep.subr.mxu0 0.0
  %367 = vmatpush2.msra.mxu0 0.0
  %368 = vmatprep.subr.mxu0 0.0
  %369 = vmatpush2.msra.mxu0 0.0
  %370 = vmatprep.subr.mxu0 0.0
  %371 = vmatpush2.msra.mxu0 0.0
  %372 = vmatprep.subr.mxu0 0.0
  %373 = vmatpush2.msra.mxu0 0.0
  %374 = vmatprep.mubr.f32.mxu0 0.0
  %375 = vmatmul.mubr.f32.gmra.mxu0 %v308
  %v376 = vpop.f32.mrf.mxu0
  %v377 = vadd.f32 0.0, %v376
  %v378 = vpop.f32.mrf.mxu0
  %v379 = vadd.f32 0.0, %v378
  %380 = vdwg.mxu0
  %v381 = vadd.f32 %v305, %v377
  %v382 = vadd.f32 %v306, %v379
  %383 = vmax.xlane.f32.xlu0 %v381
  %v384 = vpop.xlane.xlu0 %383
  %v385 = vsub.f32 %v381, %v384
  %v386 = vmul.f32 %v385, 1.442695
  %v387 = vpow.pop %v386
  %388 = vadd.xlane.f32.xlu0 %v387
  %v389 = vpop.xlane.xlu0 %388
  %v390 = vlog2.pop %v389
  %v391 = vmul.f32 %v390, 0.6931472
  %v392 = vsub.f32 %v385, %v391
  %s393 = scalar_lea.vmem %s3, 24
  %394 = vst [vmem:[%s393] sm:$0xff] %v392
  %s395 = scalar_lea.vmem %s1, 64
  %v396 = vld [vmem:[%s395] sm:$0xff]
  %v397 = vld [vmem:[%s395 + $0x8] sm:$0xff]
  %v399 = vsel %vm34, %v382, 0
  %401 = vmatprep.subr.mxu0 0.0
  %402 = vmatpush1.msra.mxu0 0.0
  %403 = vmatprep.subr.mxu0 0.0
  %404 = vmatpush1.msra.mxu0 0.0
  %405 = vmatprep.subr.mxu0 0.0
  %406 = vmatpush1.msra.mxu0 0.0
  %407 = vmatprep.subr.mxu0 0.0
  %408 = vmatpush1.msra.mxu0 0.0
  %409 = vmatprep.subr.mxu0 0.0
  %410 = vmatpush1.msra.mxu0 0.0
  %411 = vmatprep.subr.mxu0 0.0
  %412 = vmatpush1.msra.mxu0 0.0
  %413 = vmatprep.subr.mxu0 0.0
  %414 = vmatpush1.msra.mxu0 0.0
  %415 = vmatprep.subr.mxu0 0.0
  %416 = vmatpush1.msra.mxu0 0.0
  %417 = vmatprep.subr.mxu0 0.0
  %418 = vmatpush1.msra.mxu0 0.0
  %419 = vmatprep.subr.mxu0 0.0
  %420 = vmatpush1.msra.mxu0 0.0
  %421 = vmatprep.subr.mxu0 0.0
  %422 = vmatpush1.msra.mxu0 0.0
  %423 = vmatprep.subr.mxu0 0.0
  %424 = vmatpush1.msra.mxu0 0.0
  %425 = vmatprep.subr.mxu0 %v30
  %426 = vmatpush1.msra.mxu0 %v29
  %427 = vmatprep.subr.mxu0 %v28
  %428 = vmatpush1.msra.mxu0 %v27
  %429 = vmatprep.subr.mxu0 %v26
  %430 = vmatpush1.msra.mxu0 %v25
  %431 = vmatprep.subr.mxu0 %v24
  %432 = vmatpush1.msra.mxu0 %v23
  %433 = vmatprep.subr.mxu0 0.0
  %434 = vmatpush2.msra.mxu0 0.0
  %435 = vmatprep.subr.mxu0 0.0
  %436 = vmatpush2.msra.mxu0 0.0
  %437 = vmatprep.subr.mxu0 0.0
  %438 = vmatpush2.msra.mxu0 0.0
  %439 = vmatprep.subr.mxu0 0.0
  %440 = vmatpush2.msra.mxu0 0.0
  %441 = vmatprep.subr.mxu0 0.0
  %442 = vmatpush2.msra.mxu0 0.0
  %443 = vmatprep.subr.mxu0 0.0
  %444 = vmatpush2.msra.mxu0 0.0
  %445 = vmatprep.subr.mxu0 0.0
  %446 = vmatpush2.msra.mxu0 0.0
  %447 = vmatprep.subr.mxu0 0.0
  %448 = vmatpush2.msra.mxu0 0.0
  %449 = vmatprep.subr.mxu0 0.0
  %450 = vmatpush2.msra.mxu0 0.0
  %451 = vmatprep.subr.mxu0 0.0
  %452 = vmatpush2.msra.mxu0 0.0
  %453 = vmatprep.subr.mxu0 0.0
  %454 = vmatpush2.msra.mxu0 0.0
  %455 = vmatprep.subr.mxu0 0.0
  %456 = vmatpush2.msra.mxu0 0.0
  %457 = vmatprep.subr.mxu0 0.0
  %458 = vmatpush2.msra.mxu0 0.0
  %459 = vmatprep.subr.mxu0 0.0
  %460 = vmatpush2.msra.mxu0 0.0
  %461 = vmatprep.subr.mxu0 0.0
  %462 = vmatpush2.msra.mxu0 0.0
  %463 = vmatprep.subr.mxu0 0.0
  %464 = vmatpush2.msra.mxu0 0.0
  %465 = vmatprep.mubr.f32.mxu0 0.0
  %466 = vmatmul.mubr.f32.gmra.mxu0 %v399
  %v467 = vpop.f32.mrf.mxu0
  %v468 = vadd.f32 0.0, %v467
  %v469 = vpop.f32.mrf.mxu0
  %v470 = vadd.f32 0.0, %v469
  %471 = vdwg.mxu0
  %v472 = vadd.f32 %v396, %v468
  %v473 = vadd.f32 %v397, %v470
  %474 = vmax.xlane.f32.xlu0 %v472
  %v475 = vpop.xlane.xlu0 %474
  %v476 = vsub.f32 %v472, %v475
  %v477 = vmul.f32 %v476, 1.442695
  %v478 = vpow.pop %v477
  %479 = vadd.xlane.f32.xlu0 %v478
  %v480 = vpop.xlane.xlu0 %479
  %v481 = vlog2.pop %v480
  %v482 = vmul.f32 %v481, 0.6931472
  %v483 = vsub.f32 %v476, %v482
  %s484 = scalar_lea.vmem %s3, 32
  %485 = vst [vmem:[%s484] sm:$0xff] %v483
  %s486 = scalar_lea.vmem %s1, 80
  %v487 = vld [vmem:[%s486] sm:$0xff]
  %v488 = vld [vmem:[%s486 + $0x8] sm:$0xff]
  %v490 = vsel %vm34, %v473, 0
  %492 = vmatprep.subr.mxu0 0.0
  %493 = vmatpush1.msra.mxu0 0.0
  %494 = vmatprep.subr.mxu0 0.0
  %495 = vmatpush1.msra.mxu0 0.0
  %496 = vmatprep.subr.mxu0 0.0
  %497 = vmatpush1.msra.mxu0 0.0
  %498 = vmatprep.subr.mxu0 0.0
  %499 = vmatpush1.msra.mxu0 0.0
  %500 = vmatprep.subr.mxu0 0.0
  %501 = vmatpush1.msra.mxu0 0.0
  %502 = vmatprep.subr.mxu0 0.0
  %503 = vmatpush1.msra.mxu0 0.0
  %504 = vmatprep.subr.mxu0 0.0
  %505 = vmatpush1.msra.mxu0 0.0
  %506 = vmatprep.subr.mxu0 0.0
  %507 = vmatpush1.msra.mxu0 0.0
  %508 = vmatprep.subr.mxu0 0.0
  %509 = vmatpush1.msra.mxu0 0.0
  %510 = vmatprep.subr.mxu0 0.0
  %511 = vmatpush1.msra.mxu0 0.0
  %512 = vmatprep.subr.mxu0 0.0
  %513 = vmatpush1.msra.mxu0 0.0
  %514 = vmatprep.subr.mxu0 0.0
  %515 = vmatpush1.msra.mxu0 0.0
  %516 = vmatprep.subr.mxu0 %v30
  %517 = vmatpush1.msra.mxu0 %v29
  %518 = vmatprep.subr.mxu0 %v28
  %519 = vmatpush1.msra.mxu0 %v27
  %520 = vmatprep.subr.mxu0 %v26
  %521 = vmatpush1.msra.mxu0 %v25
  %522 = vmatprep.subr.mxu0 %v24
  %523 = vmatpush1.msra.mxu0 %v23
  %524 = vmatprep.subr.mxu0 0.0
  %525 = vmatpush2.msra.mxu0 0.0
  %526 = vmatprep.subr.mxu0 0.0
  %527 = vmatpush2.msra.mxu0 0.0
  %528 = vmatprep.subr.mxu0 0.0
  %529 = vmatpush2.msra.mxu0 0.0
  %530 = vmatprep.subr.mxu0 0.0
  %531 = vmatpush2.msra.mxu0 0.0
  %532 = vmatprep.subr.mxu0 0.0
  %533 = vmatpush2.msra.mxu0 0.0
  %534 = vmatprep.subr.mxu0 0.0
  %535 = vmatpush2.msra.mxu0 0.0
  %536 = vmatprep.subr.mxu0 0.0
  %537 = vmatpush2.msra.mxu0 0.0
  %538 = vmatprep.subr.mxu0 0.0
  %539 = vmatpush2.msra.mxu0 0.0
  %540 = vmatprep.subr.mxu0 0.0
  %541 = vmatpush2.msra.mxu0 0.0
  %542 = vmatprep.subr.mxu0 0.0
  %543 = vmatpush2.msra.mxu0 0.0
  %544 = vmatprep.subr.mxu0 0.0
  %545 = vmatpush2.msra.mxu0 0.0
  %546 = vmatprep.subr.mxu0 0.0
  %547 = vmatpush2.msra.mxu0 0.0
  %548 = vmatprep.subr.mxu0 0.0
  %549 = vmatpush2.msra.mxu0 0.0
  %550 = vmatprep.subr.mxu0 0.0
  %551 = vmatpush2.msra.mxu0 0.0
  %552 = vmatprep.subr.mxu0 0.0
  %553 = vmatpush2.msra.mxu0 0.0
  %554 = vmatprep.subr.mxu0 0.0
  %555 = vmatpush2.msra.mxu0 0.0
  %556 = vmatprep.mubr.f32.mxu0 0.0
  %557 = vmatmul.mubr.f32.gmra.mxu0 %v490
  %v558 = vpop.f32.mrf.mxu0
  %v559 = vadd.f32 0.0, %v558
  %v560 = vpop.f32.mrf.mxu0
  %v561 = vadd.f32 0.0, %v560
  %562 = vdwg.mxu0
  %v563 = vadd.f32 %v487, %v559
  %v564 = vadd.f32 %v488, %v561
  %565 = vmax.xlane.f32.xlu0 %v563
  %v566 = vpop.xlane.xlu0 %565
  %v567 = vsub.f32 %v563, %v566
  %v568 = vmul.f32 %v567, 1.442695
  %v569 = vpow.pop %v568
  %570 = vadd.xlane.f32.xlu0 %v569
  %v571 = vpop.xlane.xlu0 %570
  %v572 = vlog2.pop %v571
  %v573 = vmul.f32 %v572, 0.6931472
  %v574 = vsub.f32 %v567, %v573
  %s575 = scalar_lea.vmem %s3, 40
  %576 = vst [vmem:[%s575] sm:$0xff] %v574
  %s577 = scalar_lea.vmem %s1, 96
  %v578 = vld [vmem:[%s577] sm:$0xff]
  %v579 = vld [vmem:[%s577 + $0x8] sm:$0xff]
  %v581 = vsel %vm34, %v564, 0
  %583 = vmatprep.subr.mxu0 0.0
  %584 = vmatpush1.msra.mxu0 0.0
  %585 = vmatprep.subr.mxu0 0.0
  %586 = vmatpush1.msra.mxu0 0.0
  %587 = vmatprep.subr.mxu0 0.0
  %588 = vmatpush1.msra.mxu0 0.0
  %589 = vmatprep.subr.mxu0 0.0
  %590 = vmatpush1.msra.mxu0 0.0
  %591 = vmatprep.subr.mxu0 0.0
  %592 = vmatpush1.msra.mxu0 0.0
  %593 = vmatprep.subr.mxu0 0.0
  %594 = vmatpush1.msra.mxu0 0.0
  %595 = vmatprep.subr.mxu0 0.0
  %596 = vmatpush1.msra.mxu0 0.0
  %597 = vmatprep.subr.mxu0 0.0
  %598 = vmatpush1.msra.mxu0 0.0
  %599 = vmatprep.subr.mxu0 0.0
  %600 = vmatpush1.msra.mxu0 0.0
  %601 = vmatprep.subr.mxu0 0.0
  %602 = vmatpush1.msra.mxu0 0.0
  %603 = vmatprep.subr.mxu0 0.0
  %604 = vmatpush1.msra.mxu0 0.0
  %605 = vmatprep.subr.mxu0 0.0
  %606 = vmatpush1.msra.mxu0 0.0
  %607 = vmatprep.subr.mxu0 %v30
  %608 = vmatpush1.msra.mxu0 %v29
  %609 = vmatprep.subr.mxu0 %v28
  %610 = vmatpush1.msra.mxu0 %v27
  %611 = vmatprep.subr.mxu0 %v26
  %612 = vmatpush1.msra.mxu0 %v25
  %613 = vmatprep.subr.mxu0 %v24
  %614 = vmatpush1.msra.mxu0 %v23
  %615 = vmatprep.subr.mxu0 0.0
  %616 = vmatpush2.msra.mxu0 0.0
  %617 = vmatprep.subr.mxu0 0.0
  %618 = vmatpush2.msra.mxu0 0.0
  %619 = vmatprep.subr.mxu0 0.0
  %620 = vmatpush2.msra.mxu0 0.0
  %621 = vmatprep.subr.mxu0 0.0
  %622 = vmatpush2.msra.mxu0 0.0
  %623 = vmatprep.subr.mxu0 0.0
  %624 = vmatpush2.msra.mxu0 0.0
  %625 = vmatprep.subr.mxu0 0.0
  %626 = vmatpush2.msra.mxu0 0.0
  %627 = vmatprep.subr.mxu0 0.0
  %628 = vmatpush2.msra.mxu0 0.0
  %629 = vmatprep.subr.mxu0 0.0
  %630 = vmatpush2.msra.mxu0 0.0
  %631 = vmatprep.subr.mxu0 0.0
  %632 = vmatpush2.msra.mxu0 0.0
  %633 = vmatprep.subr.mxu0 0.0
  %634 = vmatpush2.msra.mxu0 0.0
  %635 = vmatprep.subr.mxu0 0.0
  %636 = vmatpush2.msra.mxu0 0.0
  %637 = vmatprep.subr.mxu0 0.0
  %638 = vmatpush2.msra.mxu0 0.0
  %639 = vmatprep.subr.mxu0 0.0
  %640 = vmatpush2.msra.mxu0 0.0
  %641 = vmatprep.subr.mxu0 0.0
  %642 = vmatpush2.msra.mxu0 0.0
  %643 = vmatprep.subr.mxu0 0.0
  %644 = vmatpush2.msra.mxu0 0.0
  %645 = vmatprep.subr.mxu0 0.0
  %646 = vmatpush2.msra.mxu0 0.0
  %647 = vmatprep.mubr.f32.mxu0 0.0
  %648 = vmatmul.mubr.f32.gmra.mxu0 %v581
  %v649 = vpop.f32.mrf.mxu0
  %v650 = vadd.f32 0.0, %v649
  %v651 = vpop.f32.mrf.mxu0
  %v652 = vadd.f32 0.0, %v651
  %653 = vdwg.mxu0
  %v654 = vadd.f32 %v578, %v650
  %v655 = vadd.f32 %v579, %v652
  %656 = vmax.xlane.f32.xlu0 %v654
  %v657 = vpop.xlane.xlu0 %656
  %v658 = vsub.f32 %v654, %v657
  %v659 = vmul.f32 %v658, 1.442695
  %v660 = vpow.pop %v659
  %661 = vadd.xlane.f32.xlu0 %v660
  %v662 = vpop.xlane.xlu0 %661
  %v663 = vlog2.pop %v662
  %v664 = vmul.f32 %v663, 0.6931472
  %v665 = vsub.f32 %v658, %v664
  %s666 = scalar_lea.vmem %s3, 48
  %667 = vst [vmem:[%s666] sm:$0xff] %v665
  %s668 = scalar_lea.vmem %s1, 112
  %v669 = vld [vmem:[%s668] sm:$0xff]
  %v670 = vld [vmem:[%s668 + $0x8] sm:$0xff]
  %v672 = vsel %vm34, %v655, 0
  %674 = vmatprep.subr.mxu0 0.0
  %675 = vmatpush1.msra.mxu0 0.0
  %676 = vmatprep.subr.mxu0 0.0
  %677 = vmatpush1.msra.mxu0 0.0
  %678 = vmatprep.subr.mxu0 0.0
  %679 = vmatpush1.msra.mxu0 0.0
  %680 = vmatprep.subr.mxu0 0.0
  %681 = vmatpush1.msra.mxu0 0.0
  %682 = vmatprep.subr.mxu0 0.0
  %683 = vmatpush1.msra.mxu0 0.0
  %684 = vmatprep.subr.mxu0 0.0
  %685 = vmatpush1.msra.mxu0 0.0
  %686 = vmatprep.subr.mxu0 0.0
  %687 = vmatpush1.msra.mxu0 0.0
  %688 = vmatprep.subr.mxu0 0.0
  %689 = vmatpush1.msra.mxu0 0.0
  %690 = vmatprep.subr.mxu0 0.0
  %691 = vmatpush1.msra.mxu0 0.0
  %692 = vmatprep.subr.mxu0 0.0
  %693 = vmatpush1.msra.mxu0 0.0
  %694 = vmatprep.subr.mxu0 0.0
  %695 = vmatpush1.msra.mxu0 0.0
  %696 = vmatprep.subr.mxu0 0.0
  %697 = vmatpush1.msra.mxu0 0.0
  %698 = vmatprep.subr.mxu0 %v30
  %699 = vmatpush1.msra.mxu0 %v29
  %700 = vmatprep.subr.mxu0 %v28
  %701 = vmatpush1.msra.mxu0 %v27
  %702 = vmatprep.subr.mxu0 %v26
  %703 = vmatpush1.msra.mxu0 %v25
  %704 = vmatprep.subr.mxu0 %v24
  %705 = vmatpush1.msra.mxu0 %v23
  %706 = vmatprep.subr.mxu0 0.0
  %707 = vmatpush2.msra.mxu0 0.0
  %708 = vmatprep.subr.mxu0 0.0
  %709 = vmatpush2.msra.mxu0 0.0
  %710 = vmatprep.subr.mxu0 0.0
  %711 = vmatpush2.msra.mxu0 0.0
  %712 = vmatprep.subr.mxu0 0.0
  %713 = vmatpush2.msra.mxu0 0.0
  %714 = vmatprep.subr.mxu0 0.0
  %715 = vmatpush2.msra.mxu0 0.0
  %716 = vmatprep.subr.mxu0 0.0
  %717 = vmatpush2.msra.mxu0 0.0
  %718 = vmatprep.subr.mxu0 0.0
  %719 = vmatpush2.msra.mxu0 0.0
  %720 = vmatprep.subr.mxu0 0.0
  %721 = vmatpush2.msra.mxu0 0.0
  %722 = vmatprep.subr.mxu0 0.0
  %723 = vmatpush2.msra.mxu0 0.0
  %724 = vmatprep.subr.mxu0 0.0
  %725 = vmatpush2.msra.mxu0 0.0
  %726 = vmatprep.subr.mxu0 0.0
  %727 = vmatpush2.msra.mxu0 0.0
  %728 = vmatprep.subr.mxu0 0.0
  %729 = vmatpush2.msra.mxu0 0.0
  %730 = vmatprep.subr.mxu0 0.0
  %731 = vmatpush2.msra.mxu0 0.0
  %732 = vmatprep.subr.mxu0 0.0
  %733 = vmatpush2.msra.mxu0 0.0
  %734 = vmatprep.subr.mxu0 0.0
  %735 = vmatpush2.msra.mxu0 0.0
  %736 = vmatprep.subr.mxu0 0.0
  %737 = vmatpush2.msra.mxu0 0.0
  %738 = vmatprep.mubr.f32.mxu0 0.0
  %739 = vmatmul.mubr.f32.gmra.mxu0 %v672
  %v740 = vpop.f32.mrf.mxu0
  %v741 = vadd.f32 0.0, %v740
  %v742 = vpop.f32.mrf.mxu0
  %v743 = vadd.f32 0.0, %v742
  %744 = vdwg.mxu0
  %v745 = vadd.f32 %v669, %v741
  %v746 = vadd.f32 %v670, %v743
  %747 = vmax.xlane.f32.xlu0 %v745
  %v748 = vpop.xlane.xlu0 %747
  %v749 = vsub.f32 %v745, %v748
  %v750 = vmul.f32 %v749, 1.442695
  %v751 = vpow.pop %v750
  %752 = vadd.xlane.f32.xlu0 %v751
  %v753 = vpop.xlane.xlu0 %752
  %v754 = vlog2.pop %v753
  %v755 = vmul.f32 %v754, 0.6931472
  %v756 = vsub.f32 %v749, %v755
  %s757 = scalar_lea.vmem %s3, 56
  %758 = vst [vmem:[%s757] sm:$0xff] %v756
  %759 = vst.msk [vmem:[%s4] sm:$0xff] %vm34, %v746
  // Predicated region
  $region18: #{rnn_forward_seq.1} parent=0 // pred_check
    _
  $region19: #{rnn_forward_seq.1} parent=0 // pred_check_branch
    %761 = sbr.rel (0) target = $region21
  $region20: #{rnn_forward_seq.1} parent=0 // pred_region
    _
  $region21: #{rnn_forward_seq.1} parent=0 // pred_fallthru
    _
  // Predicated region
  $region22: #{rnn_forward_seq.1} parent=0 // pred_check
    _
  $region23: #{rnn_forward_seq.1} parent=0 // pred_check_branch
    %763 = sbr.rel (0) target = $region25
  $region24: #{rnn_forward_seq.1} parent=0 // pred_region
    _
  $region25: #{rnn_forward_seq.1} parent=0 // pred_fallthru
    _
  // Predicated region
  $region26: #{rnn_forward_seq.1} parent=0 // pred_check
    _
  $region27: #{rnn_forward_seq.1} parent=0 // pred_check_branch
    %765 = sbr.rel (0) target = $region29
  $region28: #{rnn_forward_seq.1} parent=0 // pred_region
    _
  $region29: #{rnn_forward_seq.1} parent=0 // pred_fallthru
    _
  // Predicated region
  $region30: #{rnn_forward_seq.1} parent=0 // pred_check
    _
  $region31: #{rnn_forward_seq.1} parent=0 // pred_check_branch
    %767 = sbr.rel (0) target = $region33
  $region32: #{rnn_forward_seq.1} parent=0 // pred_region
    _
  $region33: #{rnn_forward_seq.1} parent=0 // pred_fallthru
    _

</llo_original>
